<compile_context>
chip_gen: v5e
topology: v5e:2x2
jax: 0.10.0
libtpu: 0.0.40
codegen_flags: <defaults>
</compile_context>

<pallas_src>
import jax
import jax.numpy as jnp
from jax.experimental import pallas as pl
from jax.experimental.pallas import tpu as pltpu


def _gather_row_kernel(labels_ref, table_row_ref, out_ref):
    # labels_ref:    SMEM (B,) int32 scalar-prefetch (consumed by index_maps).
    # table_row_ref: VMEM (1, 1, H) -- row labels[i] of the embedding table.
    # out_ref:       VMEM (1, 1, H) -- row i of the output.
    del labels_ref  # only used inside the index_maps
    out_ref[...] = table_row_ref[...]


def label_embedder_forward(
    labels,
    embedding_table,
    *,
    num_classes,
    dropout_prob,
    train,
    rng_key=None,
    force_drop_ids=None,
):
    """Pallas implementation of LabelEmbedder.forward."""
    labels = labels.astype(jnp.int32)
    b = labels.shape[0]
    v, h = embedding_table.shape

    # --- token_drop (classifier-free guidance), done in the wrapper ----------
    use_dropout = dropout_prob > 0
    if (train and use_dropout) or (force_drop_ids is not None):
        if force_drop_ids is None:
            if rng_key is None:
                raise ValueError(
                    "rng_key is required when train=True and dropout_prob > 0 "
                    "and force_drop_ids is None."
                )
            drop = jax.random.uniform(rng_key, (b,)) < dropout_prob
        else:
            drop = force_drop_ids == 1
        labels = jnp.where(drop, num_classes, labels).astype(jnp.int32)

    # --- row gather via scalar-prefetch data-dependent index_map -------------
    table3 = embedding_table.reshape(v, 1, h)
    itemsize = jnp.dtype(embedding_table.dtype).itemsize

    out = pl.pallas_call(
        _gather_row_kernel,
        out_shape=jax.ShapeDtypeStruct((b, 1, h), embedding_table.dtype),
        grid_spec=pltpu.PrefetchScalarGridSpec(
            num_scalar_prefetch=1,          # labels -> SMEM, visible to index_maps
            grid=(b,),
            in_specs=[
                # Fetch exactly row labels[i] of the table for grid step i.
                pl.BlockSpec((1, 1, h), lambda i, lab: (lab[i], 0, 0)),
            ],
            out_specs=pl.BlockSpec((1, 1, h), lambda i, lab: (i, 0, 0)),
        ),
        compiler_params=pltpu.CompilerParams(
            dimension_semantics=("arbitrary",),
        ),
        cost_estimate=pl.CostEstimate(
            flops=0,
            transcendentals=0,
            bytes_accessed=2 * b * h * itemsize + 4 * b,
        ),
    )(labels, table3)

    return out.reshape(b, h)


if __name__ == "__main__":
    # Small, deterministic example consistent with the module's __init__.
    num_classes = 10
    hidden_size = 128      # lane-aligned hidden dim
    dropout_prob = 0.1
    batch = 8

    key = jax.random.PRNGKey(0)
    k_tab, k_lab, k_drop = jax.random.split(key, 3)

    # nn.Embedding(num_classes + use_cfg_embedding, hidden_size) -> (11, 128)
    embedding_table = jax.random.normal(
        k_tab, (num_classes + 1, hidden_size), dtype=jnp.float32
    )
    labels = jax.random.randint(k_lab, (batch,), 0, num_classes, dtype=jnp.int32)

    # --- Test 1: deterministic CFG drop (exercises token_drop path) ---------
    force_drop_ids = jnp.array([1, 0, 0, 1, 0, 0, 0, 1], dtype=jnp.int32)
    out1 = label_embedder_forward(
        labels,
        embedding_table,
        num_classes=num_classes,
        dropout_prob=dropout_prob,
        train=True,
        rng_key=k_drop,
        force_drop_ids=force_drop_ids,
    )
    out1 = jax.block_until_ready(out1)
    labels_ref1 = jnp.where(force_drop_ids == 1, num_classes, labels)
    ref1 = jnp.take(embedding_table, labels_ref1, axis=0)
    assert out1.shape == (batch, hidden_size)
    assert jnp.allclose(out1, ref1, atol=1e-6), "mismatch vs reference (drop path)"

    # --- Test 2: eval mode, no dropout applied -------------------------------
    out2 = label_embedder_forward(
        labels,
        embedding_table,
        num_classes=num_classes,
        dropout_prob=dropout_prob,
        train=False,
    )
    out2 = jax.block_until_ready(out2)
    ref2 = jnp.take(embedding_table, labels, axis=0)
    assert jnp.allclose(out2, ref2, atol=1e-6), "mismatch vs reference (eval path)"

    # --- Test 3: training-mode random dropout (only checks row membership) ---
    out3 = label_embedder_forward(
        labels,
        embedding_table,
        num_classes=num_classes,
        dropout_prob=dropout_prob,
        train=True,
        rng_key=k_drop,
    )
    out3 = jax.block_until_ready(out3)
    # Each output row must equal either the label's row or the CFG row.
    row_lab = jnp.take(embedding_table, labels, axis=0)
    row_cfg = jnp.broadcast_to(embedding_table[num_classes], row_lab.shape)
    ok = jnp.all(
        jnp.isclose(out3, row_lab, atol=1e-6).all(-1)
        | jnp.isclose(out3, row_cfg, atol=1e-6).all(-1)
    )
    assert bool(ok), "mismatch vs reference (random-drop path)"

    print("KERNEL_OK")
</pallas_src>

<mosaic_0001>
module attributes {stable_mosaic.version = 11 : i64} {
  func.func @_gather_row_kernel(%arg0: i32, %arg1: memref<8xi32, #tpu.memory_space<smem>>, %arg2: memref<1x1x128xf32, #tpu.memory_space<vmem>>, %arg3: memref<1x1x128xf32, #tpu.memory_space<vmem>>) attributes {dimension_semantics = [#tpu.dimension_semantics<arbitrary>], iteration_bounds = array<i64: 8>, scalar_prefetch = 1 : i64, scratch_operands = 0 : i64, tpu.core_type = #tpu.core_type<tc>, window_params = [{transform_indices = @transform_0, window_bounds = array<i64: 1, 1, 128>}, {transform_indices = @transform_1, window_bounds = array<i64: 1, 1, 128>}]} {
    %c0 = arith.constant 0 : index
    %c0_0 = arith.constant 0 : index
    %c0_1 = arith.constant 0 : index
    %0 = vector.load %arg2[%c0, %c0_0, %c0_1] : memref<1x1x128xf32, #tpu.memory_space<vmem>>, vector<1x1x128xf32>
    %c0_2 = arith.constant 0 : index
    %c0_3 = arith.constant 0 : index
    %c0_4 = arith.constant 0 : index
    %1 = vector.load %arg3[%c0_2, %c0_3, %c0_4] : memref<1x1x128xf32, #tpu.memory_space<vmem>>, vector<1x1x128xf32>
    tpu.vector_store %arg3[%c0_2, %c0_3, %c0_4], %0 {strides = array<i32>} : memref<1x1x128xf32, #tpu.memory_space<vmem>>, vector<1x1x128xf32>,
    return
  }
  func.func @transform_0(%arg0: i32, %arg1: memref<8xi32, #tpu.memory_space<smem>>) -> (i32, i32, i32) {
    %0 = arith.index_cast %arg0 : i32 to index
    %1 = memref.load %arg1[%0] : memref<8xi32, #tpu.memory_space<smem>>
    %c0_i32 = arith.constant 0 : i32
    %c0_i32_0 = arith.constant 0 : i32
    %c0_i32_1 = arith.constant 0 : i32
    return %1, %c0_i32, %c0_i32_0 : i32, i32, i32
  }
  func.func @transform_1(%arg0: i32, %arg1: memref<8xi32, #tpu.memory_space<smem>>) -> (i32, i32, i32) {
    %c0_i32 = arith.constant 0 : i32
    %c0_i32_0 = arith.constant 0 : i32
    %c0_i32_1 = arith.constant 0 : i32
    return %arg0, %c0_i32, %c0_i32_0 : i32, i32, i32
  }
}

</mosaic_0001>

<llo_original>
// kernel: tpu_custom_call.1
$region0: #{tpu_custom_call.1}
  #allocation0 [shape = 'u32[]', space=smem, size = 0x4, offset = 0x4, fixed_abs, tag = 'smem constant byte address 0x4 - core index']
  #allocation1 [shape = 'u32[72,128]{1,0:T(1,128)}', space=vmem, size = 0x9000, scoped, tag = 'internal scratch']
  #allocation2 [shape = 's32[1]{0}', space=sflag, size = 0x4, scoped, tag = 'scoped memory for tpu_custom_call.1']
  #allocation3 [shape = 'u8[512]{0}', space=smem, size = 0x200, scoped, tag = 'prefetched SMEM operand 0']
  %s0 = inlined_call_operand.hbm [shape: s32[8], index: 0, kind: input, shape index: {}]
  %s1 = inlined_call_operand.hbm [shape: f32[11,1,128], index: 1, kind: input, shape index: {}]
  %s2 = inlined_call_operand.hbm [shape: f32[8,1,128], index: 2, kind: output, shape index: {}]
  %s3 = sld [smem:[#allocation0]]
  $region41: #{tpu_custom_call.1} parent=0
    _
  %s5 = ssub.s32 1, %s3
  %s6 = scalar_select 0, %s5, %s3
  %s8 = sshll.u32 %s0, 4
  %s9 = int_to_ptr.hbm [resolvable:$true] %s8
  %11 = dma.hbm_to_smem %s9, 16, [#allocation3], [#allocation2]
  %13 = dma.done [#allocation2], 16
  %14 = sfence
  $region1: #{tpu_custom_call.1} parent=0
    #allocation4 [shape = 'u8[1024]{0}', space=vmem, size = 0x400, scoped, tag = 'input window, operand 1']
    #allocation5 [shape = 's32[2]{0}', space=sflag, size = 0x8, scoped, tag = 'scoped memory for tpu_custom_call.1']
    #allocation6 [shape = 's32[2]{0}', space=sflag, size = 0x8, scoped, tag = 'scoped memory for tpu_custom_call.1']
    #allocation7 [shape = 'u8[1024]{0}', space=vmem, size = 0x400, scoped, tag = 'output window, operand 0']
    %15 = vsyncpa [#allocation5], 0
    %s16 = scalar_lea.sflag [#allocation5], 1
    %17 = vsyncpa %s16, 0
    %18 = vsyncpa [#allocation6], 0
    %s19 = scalar_lea.sflag [#allocation6], 1
    %20 = vsyncpa %s19, 0
    loop: start=0, step=1, limit=10
    $region2: #{tpu_custom_call.1} parent=1 // loop_pre_header
      _
    $region3: #{tpu_custom_call.1} parent=1 // loop_header
      %s22 = sphi 0, %s26
      %p23 = scmp.ge.s32.totalorder %s22, 10
      %s34 = sphi 0, %s36
      %s37 = sphi 0, %s34
      %s38 = sphi 0, %s37
      %s54 = sphi 0, %s38
      %s60 = sphi 0, %s62
      %s63 = sphi 0, %s60
      %s64 = sphi 0, %s63
      %s80 = sphi 0, %s64
    $region4: #{tpu_custom_call.1} parent=1 // loop_header_branch
      %25 = sbr.rel (%p23) target = $region8
    $region5: #{tpu_custom_call.1} parent=1 // loop_body
      %s27 = ssub.s32 %s22, 1
      %s28 = ssub.s32 %s22, 2
      %s29 = sadd.s32 %s22, 1
      %s30 = sld [smem:[#allocation3 + %s22]]
      %s31 = sld [smem:[#allocation3 + %s29]]
      %s32 = ssub.s32 %s30, %s31
      %p33 = scmp.eq.s32.totalorder %s32, 0
      %s35 = sadd.s32 %s34, 1
      %s36 = scalar_select %p33, %s34, %s35
      %p39 = pneg %p33
      %p40 = scmp.eq.s32.totalorder %s22, 7
      %p41 = por %p39, %p40
      %p42 = scmp.ne.s32.totalorder %s34, %s37
      %p43 = scmp.eq.s32.totalorder %s22, 0
      %p44 = por %p42, %p43
      %p45 = scmp.ne.s32.totalorder %s34, %s37
      %p46 = scmp.eq.s32.totalorder %s27, 7
      %p47 = por %p45, %p46
      %p48 = scmp.ne.s32.totalorder %s37, %s38
      %p49 = scmp.eq.s32.totalorder %s27, 0
      %p50 = por %p48, %p49
      %p51 = scmp.ne.s32.totalorder %s37, %s38
      %p52 = scmp.eq.s32.totalorder %s28, 7
      %p53 = por %p51, %p52
      %p55 = scmp.ne.s32.totalorder %s38, %s54
      %p56 = scmp.eq.s32.totalorder %s28, 0
      %p57 = por %p55, %p56
      %s58 = ssub.s32 %s22, %s29
      %p59 = scmp.eq.s32.totalorder %s58, 0
      %s61 = sadd.s32 %s60, 1
      %s62 = scalar_select %p59, %s60, %s61
      %p65 = pneg %p59
      %p66 = scmp.eq.s32.totalorder %s22, 7
      %p67 = por %p65, %p66
      %p68 = scmp.ne.s32.totalorder %s60, %s63
      %p69 = scmp.eq.s32.totalorder %s22, 0
      %p70 = por %p68, %p69
      %p71 = scmp.ne.s32.totalorder %s60, %s63
      %p72 = scmp.eq.s32.totalorder %s27, 7
      %p73 = por %p71, %p72
      %p74 = scmp.ne.s32.totalorder %s63, %s64
      %p75 = scmp.eq.s32.totalorder %s27, 0
      %p76 = por %p74, %p75
      %p77 = scmp.ne.s32.totalorder %s63, %s64
      %p78 = scmp.eq.s32.totalorder %s28, 7
      %p79 = por %p77, %p78
      %p81 = scmp.ne.s32.totalorder %s64, %s80
      %p82 = scmp.eq.s32.totalorder %s28, 0
      %p83 = por %p81, %p82
      %p84 = scmp.le.s32.totalorder 1, %s22
      %p85 = scmp.lt.s32.totalorder %s22, 9
      %p86 = pnand %p84, %p85
      %p87 = pneg %p86
      // Predicated region
      $region9: #{tpu_custom_call.1} parent=5 // pred_check
        _
      $region10: #{tpu_custom_call.1} parent=5 // pred_check_branch
        %89 = sbr.rel (%p86) target = $region12
      $region11: #{tpu_custom_call.1} parent=5 // pred_region
        %s90 = ssub.s32 %s22, 1
      $region12: #{tpu_custom_call.1} parent=5 // pred_fallthru
        _
      %p91 = scmp.lt.s32.totalorder %s22, 8
      // Predicated region
      $region13: #{tpu_custom_call.1} parent=5 // pred_check
        %p92 = pneg %p91
      $region14: #{tpu_custom_call.1} parent=5 // pred_check_branch
        %94 = sbr.rel (%p92) target = $region16
      $region15: #{tpu_custom_call.1} parent=5 // pred_region
        // Predicated region
        $region17: #{tpu_custom_call.1} parent=15 // pred_check
          %p95 = pneg %p44
        $region18: #{tpu_custom_call.1} parent=15 // pred_check_branch
          %97 = sbr.rel (%p95) target = $region20
        $region19: #{tpu_custom_call.1} parent=15 // pred_region
          %s98 = sand.u32 %s34, 1
          %s99 = scalar_lea.sflag [#allocation5], %s98
          %s100 = sand.u32 %s34, 1
          %s101 = scalar_lea.vmem [#allocation4], %s100
          %s102 = sld [smem:[#allocation3 + %s22]]
          %104 = vsyncadd %s99, 0
          %s105 = scalar_lea.hbm %s1, %s102
          %s107 = sshll.u32 %s105, 4
          %s108 = int_to_ptr.hbm [resolvable:$true] %s107
          %s109 = sshll.u32 %s101, 4
          %s110 = int_to_ptr.vmem [resolvable:$true] %s109
          %112 = dma.hbm_to_vmem [thread:$0]  %s108, 16, %s110, %s99
        $region20: #{tpu_custom_call.1} parent=15 // pred_fallthru
          _
      $region16: #{tpu_custom_call.1} parent=5 // pred_fallthru
        _
      %p113 = scmp.le.s32.totalorder 1, %s22
      %p114 = scmp.lt.s32.totalorder %s22, 9
      %p115 = pnand %p113, %p114
      %p116 = pneg %p115
      // Predicated region
      $region21: #{tpu_custom_call.1} parent=5 // pred_check
        _
      $region22: #{tpu_custom_call.1} parent=5 // pred_check_branch
        %118 = sbr.rel (%p115) target = $region24
      $region23: #{tpu_custom_call.1} parent=5 // pred_region
        %s119 = ssub.s32 %s22, 1
        %s120 = sand.u32 %s37, 1
        %s121 = scalar_lea.sflag [#allocation5], %s120
        %s122 = sand.u32 %s37, 1
        %s123 = scalar_lea.vmem [#allocation4], %s122
        // Predicated region
        $region25: #{tpu_custom_call.1} parent=23 // pred_check
          %p124 = pneg %p50
        $region26: #{tpu_custom_call.1} parent=23 // pred_check_branch
          %126 = sbr.rel (%p124) target = $region28
        $region27: #{tpu_custom_call.1} parent=23 // pred_region
          %128 = dma.done %s121, 16
        $region28: #{tpu_custom_call.1} parent=23 // pred_fallthru
          _
        %s129 = sand.u32 %s37, 1
        %s130 = scalar_lea.sflag [#allocation5], %s129
        %s131 = sand.u32 %s37, 1
        %s132 = scalar_lea.vmem [#allocation4], %s131
        %p133 = pneg %p50
        %p134 = pneg %p47
        %p135 = pneg %p76
        %p136 = pneg %p73
        %s137 = sand.u32 %s63, 1
        %s138 = scalar_lea.sflag [#allocation6], %s137
        %s139 = sand.u32 %s63, 1
        %s140 = scalar_lea.vmem [#allocation7], %s139
        %s141 = sld [smem:[#allocation3 + %s27]]
        %v142 = vld [vmem:[%s123] sm:$0x1]
        %143 = vst [vmem:[%s140] sm:$0x1] %v142
        %s144 = sand.u32 %s63, 1
        %s145 = scalar_lea.sflag [#allocation6], %s144
        %s146 = sand.u32 %s63, 1
        %s147 = scalar_lea.vmem [#allocation7], %s146
        // Predicated region
        $region29: #{tpu_custom_call.1} parent=23 // pred_check
          %p148 = pneg %p73
        $region30: #{tpu_custom_call.1} parent=23 // pred_check_branch
          %150 = sbr.rel (%p148) target = $region32
        $region31: #{tpu_custom_call.1} parent=23 // pred_region
          %152 = vsyncadd %s145, 0
          %s153 = scalar_lea.hbm %s2, %s27
          %s155 = sshll.u32 %s147, 4
          %s156 = int_to_ptr.vmem [resolvable:$true] %s155
          %s157 = sshll.u32 %s153, 4
          %s158 = int_to_ptr.hbm [resolvable:$true] %s157
          %160 = dma.vmem_to_hbm [thread:$0]  %s156, 16, %s158, %s145
        $region32: #{tpu_custom_call.1} parent=23 // pred_fallthru
          _
      $region24: #{tpu_custom_call.1} parent=5 // pred_fallthru
        _
      %p161 = scmp.le.s32.totalorder 2, %s22
      // Predicated region
      $region33: #{tpu_custom_call.1} parent=5 // pred_check
        %p162 = pneg %p161
      $region34: #{tpu_custom_call.1} parent=5 // pred_check_branch
        %164 = sbr.rel (%p162) target = $region36
      $region35: #{tpu_custom_call.1} parent=5 // pred_region
        %s165 = ssub.s32 %s22, 2
        // Predicated region
        $region37: #{tpu_custom_call.1} parent=35 // pred_check
          %p166 = pneg %p79
        $region38: #{tpu_custom_call.1} parent=35 // pred_check_branch
          %168 = sbr.rel (%p166) target = $region40
        $region39: #{tpu_custom_call.1} parent=35 // pred_region
          %s169 = sand.u32 %s64, 1
          %s170 = scalar_lea.sflag [#allocation6], %s169
          %s171 = sand.u32 %s64, 1
          %s172 = scalar_lea.vmem [#allocation7], %s171
          %174 = dma.done %s170, 16
        $region40: #{tpu_custom_call.1} parent=35 // pred_fallthru
          _
      $region36: #{tpu_custom_call.1} parent=5 // pred_fallthru
        _
    $region6: #{tpu_custom_call.1} parent=1 // loop_footer
      %s26 = sadd.s32 1, %s22
    $region7: #{tpu_custom_call.1} parent=1 // loop_footer_branch
      %21 = sbr.rel target = $region3
    $region8: #{tpu_custom_call.1} parent=1 // loop_exit
      _
    %175 = vsyncpa [#allocation5], 1
    %s176 = scalar_lea.sflag [#allocation5], 1
    %177 = vsyncpa %s176, 1
    %178 = vsyncpa [#allocation6], 1
    %s179 = scalar_lea.sflag [#allocation6], 1
    %180 = vsyncpa %s179, 1

</llo_original>
